<compile_context>
chip_gen: v6e
topology: v6e:2x2x1
jax: 0.10.0
libtpu: 0.0.40
codegen_flags: <defaults>
</compile_context>

<pallas_src>
import jax
import jax.numpy as jnp
from jax.experimental import pallas as pl
from jax.experimental.pallas import tpu as pltpu


def _round_up(n, m):
    return ((n + m - 1) // m) * m


def policy_net_kernel(xT_ref, w1_ref, b1_ref, w2_ref, b2_ref, o_ref):
    # fc1: (hidden, state) @ (state, tb) on the MXU, bf16 operands, f32 acc.
    xT = xT_ref[...].astype(jnp.bfloat16)            # (state_dim, tb), lane-dense
    hT = jnp.dot(w1_ref[...], xT, preferred_element_type=jnp.float32)
    hT = jnp.maximum(hT + b1_ref[...], 0.0)          # (hidden, tb) f32

    # fc2: (action, hidden) @ (hidden, tb), bf16 MXU, f32 acc.
    logitsT = jnp.dot(w2_ref[...], hT.astype(jnp.bfloat16),
                      preferred_element_type=jnp.float32)
    logitsT = logitsT + b2_ref[...]                  # (action_dim, tb) f32

    if o_ref.shape[0] == 2:
        # 2-action softmax == sigmoid of the logit difference.  Straight-line
        # VPU + EUP work (one exp, one exact divide), no cross-lane/sublane
        # reductions, and p0 + p1 == 1 up to a single rounding.
        d = logitsT[1:2, :] - logitsT[0:1, :]
        p1 = 1.0 / (1.0 + jnp.exp(-d))
        o_ref[...] = jnp.concatenate([1.0 - p1, p1], axis=0).astype(o_ref.dtype)
    else:
        # General exact softmax over the action (sublane) axis.
        m = jnp.max(logitsT, axis=0, keepdims=True)
        e = jnp.exp(logitsT - m)
        o_ref[...] = (e / jnp.sum(e, axis=0, keepdims=True)).astype(o_ref.dtype)


def policy_net_forward(x, w1, b1, w2, b2, *, block_batch=2048, num_tensorcores=1):
    """PolicyNet forward.

    x:  (batch, state_dim) f32  (PyTorch layout)
    w1: (hidden_dim, state_dim) bf16, b1: (hidden_dim, 1) f32
    w2: (action_dim, hidden_dim) bf16, b2: (action_dim, 1) f32
    Returns (batch, action_dim) f32 softmax probabilities (torch dim=1).

    The batch lives on the 128-lane axis inside the kernel (lane-dense input,
    compute and output).  block_batch caps the lane tile (multiple of 128);
    num_tensorcores=2 keeps at least two "parallel" grid steps on v7x megacore.
    """
    batch, state_dim = x.shape
    hidden_dim = w1.shape[0]
    action_dim = w2.shape[0]

    block_batch = max(128, (block_batch // 128) * 128)
    padded = _round_up(batch, 128)
    tb = min(block_batch, padded)
    if num_tensorcores > 1:
        per_core = _round_up(-(-padded // num_tensorcores), 128)
        tb = min(tb, per_core)
    padded = _round_up(batch, tb)

    # Layout plumbing: batch onto lanes.  (Tiny (4, B) copy; for large rollout
    # batches choose tb to divide the batch so only the final ragged call pads.)
    xT = x.T
    if padded != batch:
        xT = jnp.pad(xT, ((0, 0), (0, padded - batch)))

    outT = pl.pallas_call(
        policy_net_kernel,
        out_shape=jax.ShapeDtypeStruct((action_dim, padded), jnp.float32),
        grid=(padded // tb,),
        in_specs=[
            pl.BlockSpec((state_dim, tb), lambda i: (0, i)),           # x^T tile
            pl.BlockSpec((hidden_dim, state_dim), lambda i: (0, 0)),   # w1 (resident)
            pl.BlockSpec((hidden_dim, 1), lambda i: (0, 0)),           # b1 (resident)
            pl.BlockSpec((action_dim, hidden_dim), lambda i: (0, 0)),  # w2 (resident)
            pl.BlockSpec((action_dim, 1), lambda i: (0, 0)),           # b2 (resident)
        ],
        out_specs=pl.BlockSpec((action_dim, tb), lambda i: (0, i)),    # lane-dense
        compiler_params=pltpu.CompilerParams(
            dimension_semantics=("parallel",),
        ),
    )(xT, w1, b1, w2, b2)

    outT = outT[:, :batch] if padded != batch else outT
    return outT.T  # back to PyTorch (batch, action_dim)


def init_params(key, state_dim, hidden_dim, action_dim):
    """torch.nn.Linear-style init: U(-1/sqrt(fan_in), 1/sqrt(fan_in)).
    Weights are returned in kernel layout (out_features, in_features) as bf16
    (cast once, stays bf16 in HBM); biases are f32 (out_features, 1) columns."""
    k1, k2, k3, k4 = jax.random.split(key, 4)
    bound1 = 1.0 / jnp.sqrt(jnp.float32(state_dim))
    bound2 = 1.0 / jnp.sqrt(jnp.float32(hidden_dim))
    w1 = jax.random.uniform(k1, (hidden_dim, state_dim), jnp.float32, -bound1, bound1)
    b1 = jax.random.uniform(k2, (hidden_dim, 1), jnp.float32, -bound1, bound1)
    w2 = jax.random.uniform(k3, (action_dim, hidden_dim), jnp.float32, -bound2, bound2)
    b2 = jax.random.uniform(k4, (action_dim, 1), jnp.float32, -bound2, bound2)
    return w1.astype(jnp.bfloat16), b1, w2.astype(jnp.bfloat16), b2


def reference_forward(x, w1, b1, w2, b2):
    """Pure-JAX f32 reference with identical (bf16-rounded) weight values."""
    w1f = w1.astype(jnp.float32)
    w2f = w2.astype(jnp.float32)
    h = jnp.maximum(x @ w1f.T + b1[:, 0], 0.0)
    logits = h @ w2f.T + b2[:, 0]
    return jax.nn.softmax(logits, axis=1)


if __name__ == "__main__":
    # CartPole-v1: state_dim=4, action_dim=2; hidden_dim=128 per the module.
    state_dim, hidden_dim, action_dim = 4, 128, 2
    batch = 8  # small demo batch

    key = jax.random.PRNGKey(0)
    k_x, k_p, k_x2 = jax.random.split(key, 3)
    x = jax.random.normal(k_x, (batch, state_dim), jnp.float32)
    w1, b1, w2, b2 = init_params(k_p, state_dim, hidden_dim, action_dim)

    out = jax.block_until_ready(policy_net_forward(x, w1, b1, w2, b2))
    ref = reference_forward(x, w1, b1, w2, b2)

    assert out.shape == (batch, action_dim)
    assert jnp.allclose(out, ref, atol=5e-3, rtol=0.0)
    assert jnp.allclose(jnp.sum(out, axis=1), 1.0, atol=1e-4)

    # Larger ragged batch exercising a multi-step "parallel" grid (v7x megacore
    # configuration: at least 2 grid steps so both TensorCores get work).
    batch2 = 300
    x2 = jax.random.normal(k_x2, (batch2, state_dim), jnp.float32)
    out2 = jax.block_until_ready(
        policy_net_forward(x2, w1, b1, w2, b2, num_tensorcores=2))
    ref2 = reference_forward(x2, w1, b1, w2, b2)
    assert out2.shape == (batch2, action_dim)
    assert jnp.allclose(out2, ref2, atol=5e-3, rtol=0.0)
    assert jnp.allclose(jnp.sum(out2, axis=1), 1.0, atol=1e-4)

    print("KERNEL_OK")
</pallas_src>

<mosaic_0001>
module attributes {stable_mosaic.version = 11 : i64} {
  func.func @policy_net_kernel(%arg0: i32, %arg1: memref<4x128xf32, #tpu.memory_space<vmem>>, %arg2: memref<128x4xbf16, #tpu.memory_space<vmem>>, %arg3: memref<128x1xf32, #tpu.memory_space<vmem>>, %arg4: memref<2x128xbf16, #tpu.memory_space<vmem>>, %arg5: memref<2x1xf32, #tpu.memory_space<vmem>>, %arg6: memref<2x128xf32, #tpu.memory_space<vmem>>) attributes {dimension_semantics = [#tpu.dimension_semantics<parallel>], iteration_bounds = array<i64: 1>, scalar_prefetch = 0 : i64, scratch_operands = 0 : i64, tpu.core_type = #tpu.core_type<tc>, window_params = [{transform_indices = @transform_0, window_bounds = array<i64: 4, 128>}, {pipeline_mode = #tpu.pipeline_mode<synchronous>, transform_indices = @transform_1, window_bounds = array<i64: 128, 4>}, {pipeline_mode = #tpu.pipeline_mode<synchronous>, transform_indices = @transform_2, window_bounds = array<i64: 128, 1>}, {pipeline_mode = #tpu.pipeline_mode<synchronous>, transform_indices = @transform_3, window_bounds = array<i64: 2, 128>}, {pipeline_mode = #tpu.pipeline_mode<synchronous>, transform_indices = @transform_4, window_bounds = array<i64: 2, 1>}, {transform_indices = @transform_5, window_bounds = array<i64: 2, 128>}]} {
    %c0 = arith.constant 0 : index
    %c0_0 = arith.constant 0 : index
    %0 = vector.load %arg1[%c0, %c0_0] : memref<4x128xf32, #tpu.memory_space<vmem>>, vector<4x128xf32>
    %1 = arith.truncf %0 : vector<4x128xf32> to vector<4x128xbf16>
    %c0_1 = arith.constant 0 : index
    %c0_2 = arith.constant 0 : index
    %2 = vector.load %arg2[%c0_1, %c0_2] : memref<128x4xbf16, #tpu.memory_space<vmem>>, vector<128x4xbf16>
    %cst = arith.constant dense<0.000000e+00> : vector<128x128xf32>
    %3 = tpu.matmul %2, %1, %cst {dimension_numbers = #tpu.dot_dimension_numbers<[1], [0], [0], [1], [0, 0, 1, 1], [], []>} : vector<128x4xbf16>, vector<4x128xbf16>, vector<128x128xf32> -> vector<128x128xf32>
    %c0_3 = arith.constant 0 : index
    %c0_4 = arith.constant 0 : index
    %4 = vector.load %arg3[%c0_3, %c0_4] : memref<128x1xf32, #tpu.memory_space<vmem>>, vector<128x1xf32>
    %5 = vector.broadcast %4 : vector<128x1xf32> to vector<128x128xf32>
    %6 = arith.addf %3, %5 : vector<128x128xf32>
    %cst_5 = arith.constant 0.000000e+00 : f32
    %7 = vector.broadcast %cst_5 : f32 to vector<128x128xf32>
    %8 = arith.maximumf %6, %7 : vector<128x128xf32>
    %c0_6 = arith.constant 0 : index
    %c0_7 = arith.constant 0 : index
    %9 = vector.load %arg4[%c0_6, %c0_7] : memref<2x128xbf16, #tpu.memory_space<vmem>>, vector<2x128xbf16>
    %10 = arith.truncf %8 : vector<128x128xf32> to vector<128x128xbf16>
    %cst_8 = arith.constant dense<0.000000e+00> : vector<2x128xf32>
    %11 = tpu.matmul %9, %10, %cst_8 {dimension_numbers = #tpu.dot_dimension_numbers<[1], [0], [0], [1], [0, 0, 1, 1], [], []>} : vector<2x128xbf16>, vector<128x128xbf16>, vector<2x128xf32> -> vector<2x128xf32>
    %c0_9 = arith.constant 0 : index
    %c0_10 = arith.constant 0 : index
    %12 = vector.load %arg5[%c0_9, %c0_10] : memref<2x1xf32, #tpu.memory_space<vmem>>, vector<2x1xf32>
    %13 = vector.broadcast %12 : vector<2x1xf32> to vector<2x128xf32>
    %14 = arith.addf %11, %13 : vector<2x128xf32>
    %15 = vector.extract_strided_slice %14 {offsets = [1, 0], sizes = [1, 128], strides = [1, 1]} : vector<2x128xf32> to vector<1x128xf32>
    %16 = vector.extract_strided_slice %14 {offsets = [0, 0], sizes = [1, 128], strides = [1, 1]} : vector<2x128xf32> to vector<1x128xf32>
    %17 = arith.subf %15, %16 : vector<1x128xf32>
    %cst_11 = arith.constant 0.000000e+00 : f32
    %18 = vector.broadcast %cst_11 : f32 to vector<1x128xf32>
    %19 = arith.subf %18, %17 : vector<1x128xf32>
    %20 = math.exp %19 : vector<1x128xf32>
    %cst_12 = arith.constant 1.000000e+00 : f32
    %21 = vector.broadcast %cst_12 : f32 to vector<1x128xf32>
    %22 = arith.addf %21, %20 : vector<1x128xf32>
    %cst_13 = arith.constant 1.000000e+00 : f32
    %23 = vector.broadcast %cst_13 : f32 to vector<1x128xf32>
    %24 = arith.divf %23, %22 : vector<1x128xf32>
    %cst_14 = arith.constant 1.000000e+00 : f32
    %25 = vector.broadcast %cst_14 : f32 to vector<1x128xf32>
    %26 = arith.subf %25, %24 : vector<1x128xf32>
    %27 = tpu.concatenate %26, %24 in 0 : vector<1x128xf32>, vector<1x128xf32> -> vector<2x128xf32>
    %c0_15 = arith.constant 0 : index
    %c0_16 = arith.constant 0 : index
    %28 = vector.load %arg6[%c0_15, %c0_16] : memref<2x128xf32, #tpu.memory_space<vmem>>, vector<2x128xf32>
    tpu.vector_store %arg6[%c0_15, %c0_16], %27 {strides = array<i32>} : memref<2x128xf32, #tpu.memory_space<vmem>>, vector<2x128xf32>,
    return
  }
  func.func @transform_0(%arg0: i32) -> (i32, i32) {
    %c0_i32 = arith.constant 0 : i32
    %c0_i32_0 = arith.constant 0 : i32
    return %c0_i32, %arg0 : i32, i32
  }
  func.func @transform_1(%arg0: i32) -> (i32, i32) {
    %c0_i32 = arith.constant 0 : i32
    %c0_i32_0 = arith.constant 0 : i32
    %c0_i32_1 = arith.constant 0 : i32
    return %c0_i32, %c0_i32_0 : i32, i32
  }
  func.func @transform_2(%arg0: i32) -> (i32, i32) {
    %c0_i32 = arith.constant 0 : i32
    %c0_i32_0 = arith.constant 0 : i32
    %c0_i32_1 = arith.constant 0 : i32
    return %c0_i32, %c0_i32_0 : i32, i32
  }
  func.func @transform_3(%arg0: i32) -> (i32, i32) {
    %c0_i32 = arith.constant 0 : i32
    %c0_i32_0 = arith.constant 0 : i32
    %c0_i32_1 = arith.constant 0 : i32
    return %c0_i32, %c0_i32_0 : i32, i32
  }
  func.func @transform_4(%arg0: i32) -> (i32, i32) {
    %c0_i32 = arith.constant 0 : i32
    %c0_i32_0 = arith.constant 0 : i32
    %c0_i32_1 = arith.constant 0 : i32
    return %c0_i32, %c0_i32_0 : i32, i32
  }
  func.func @transform_5(%arg0: i32) -> (i32, i32) {
    %c0_i32 = arith.constant 0 : i32
    %c0_i32_0 = arith.constant 0 : i32
    return %c0_i32, %arg0 : i32, i32
  }
}

</mosaic_0001>

<llo_original>
// kernel: tpu_custom_call.1
$region0: #{tpu_custom_call.1}
  #allocation0 [shape = 'u32[]', space=smem, size = 0x4, offset = 0x4, fixed_abs, tag = 'smem constant byte address 0x4 - core index']
  #allocation1 [shape = 'u32[144,128]{1,0:T(1,128)}', space=vmem, size = 0x12000, scoped, tag = 'internal scratch']
  %s0 = inlined_call_operand.vmem [shape: f32[4,128], index: 0, kind: input, shape index: {}]
  %s1 = inlined_call_operand.vmem [shape: bf16[128,4], index: 1, kind: input, shape index: {}]
  %s2 = inlined_call_operand.vmem [shape: f32[128,1], index: 2, kind: input, shape index: {}]
  %s3 = inlined_call_operand.vmem [shape: bf16[2,128], index: 3, kind: input, shape index: {}]
  %s4 = inlined_call_operand.vmem [shape: f32[2,1], index: 4, kind: input, shape index: {}]
  %s5 = inlined_call_operand.hbm [shape: f32[2,128], index: 5, kind: output, shape index: {}]
  %s6 = sld [smem:[#allocation0]]
  $region30: #{tpu_custom_call.1} parent=0
    _
  %s8 = ssub.s32 1, %s6
  %s9 = scalar_select 0, %s8, %s6
  $region1: #{tpu_custom_call.1} parent=0
    #allocation2 [shape = 'u8[1024]{0}', space=vmem, size = 0x400, scoped, tag = 'output window, operand 0, single buffered']
    #allocation3 [shape = 's32[1]{0}', space=sflag, size = 0x4, scoped, tag = 'scoped memory for tpu_custom_call.1']
    %10 = vsyncpa [#allocation3], 0
    // Predicated region
    $region2: #{tpu_custom_call.1} parent=1 // pred_check
      _
    $region3: #{tpu_custom_call.1} parent=1 // pred_check_branch
      %12 = sbr.rel (0) target = $region5
    $region4: #{tpu_custom_call.1} parent=1 // pred_region
      _
    $region5: #{tpu_custom_call.1} parent=1 // pred_fallthru
      _
    // Predicated region
    $region6: #{tpu_custom_call.1} parent=1 // pred_check
      _
    $region7: #{tpu_custom_call.1} parent=1 // pred_check_branch
      %14 = sbr.rel (0) target = $region9
    $region8: #{tpu_custom_call.1} parent=1 // pred_region
      _
    $region9: #{tpu_custom_call.1} parent=1 // pred_fallthru
      _
    // Predicated region
    $region10: #{tpu_custom_call.1} parent=1 // pred_check
      _
    $region11: #{tpu_custom_call.1} parent=1 // pred_check_branch
      %16 = sbr.rel (0) target = $region13
    $region12: #{tpu_custom_call.1} parent=1 // pred_region
      _
    $region13: #{tpu_custom_call.1} parent=1 // pred_fallthru
      _
    // Predicated region
    $region14: #{tpu_custom_call.1} parent=1 // pred_check
      _
    $region15: #{tpu_custom_call.1} parent=1 // pred_check_branch
      %18 = sbr.rel (0) target = $region17
    $region16: #{tpu_custom_call.1} parent=1 // pred_region
      _
    $region17: #{tpu_custom_call.1} parent=1 // pred_fallthru
      _
    // Predicated region
    $region18: #{tpu_custom_call.1} parent=1 // pred_check
      _
    $region19: #{tpu_custom_call.1} parent=1 // pred_check_branch
      %20 = sbr.rel (0) target = $region21
    $region20: #{tpu_custom_call.1} parent=1 // pred_region
      _
    $region21: #{tpu_custom_call.1} parent=1 // pred_fallthru
      _
    %v22 = vld [vmem:[%s0] sm:$0xf]
    %v23 = vpack.c.bf16 %v22, %v22
    %v24 = vld [vmem:[%s1] sm:$0xf]
    %v25 = vld [vmem:[%s1 + $0x4] sm:$0xf]
    %v26 = vld [vmem:[%s1 + $0x8] sm:$0xf]
    %v27 = vld [vmem:[%s1 + $0xc] sm:$0xf]
    %v28 = vld [vmem:[%s1 + $0x10] sm:$0xf]
    %v29 = vld [vmem:[%s1 + $0x14] sm:$0xf]
    %v30 = vld [vmem:[%s1 + $0x18] sm:$0xf]
    %v31 = vld [vmem:[%s1 + $0x1c] sm:$0xf]
    %v32 = vld [vmem:[%s1 + $0x20] sm:$0xf]
    %v33 = vld [vmem:[%s1 + $0x24] sm:$0xf]
    %v34 = vld [vmem:[%s1 + $0x28] sm:$0xf]
    %v35 = vld [vmem:[%s1 + $0x2c] sm:$0xf]
    %v36 = vld [vmem:[%s1 + $0x30] sm:$0xf]
    %v37 = vld [vmem:[%s1 + $0x34] sm:$0xf]
    %v38 = vld [vmem:[%s1 + $0x38] sm:$0xf]
    %v39 = vld [vmem:[%s1 + $0x3c] sm:$0xf]
    %v40 = vld [vmem:[%s2] sm:$0xff]
    %v41 = vld [vmem:[%s2 + $0x8] sm:$0xff]
    %v42 = vld [vmem:[%s2 + $0x10] sm:$0xff]
    %v43 = vld [vmem:[%s2 + $0x18] sm:$0xff]
    %v44 = vld [vmem:[%s2 + $0x20] sm:$0xff]
    %v45 = vld [vmem:[%s2 + $0x28] sm:$0xff]
    %v46 = vld [vmem:[%s2 + $0x30] sm:$0xff]
    %v47 = vld [vmem:[%s2 + $0x38] sm:$0xff]
    %v48 = vld [vmem:[%s2 + $0x40] sm:$0xff]
    %v49 = vld [vmem:[%s2 + $0x48] sm:$0xff]
    %v50 = vld [vmem:[%s2 + $0x50] sm:$0xff]
    %v51 = vld [vmem:[%s2 + $0x58] sm:$0xff]
    %v52 = vld [vmem:[%s2 + $0x60] sm:$0xff]
    %v53 = vld [vmem:[%s2 + $0x68] sm:$0xff]
    %v54 = vld [vmem:[%s2 + $0x70] sm:$0xff]
    %v55 = vld [vmem:[%s2 + $0x78] sm:$0xff]
    %57 = vset.pattern.permute.xlu0 0
    %58 = vperm.xlu0 %57, %v40
    %v59 = vpop.permute.xlu0 %58
    %62 = vset.pattern.permute.xlu0 0
    %63 = vperm.xlu0 %62, %v41
    %v64 = vpop.permute.xlu0 %63
    %67 = vset.pattern.permute.xlu0 0
    %68 = vperm.xlu0 %67, %v42
    %v69 = vpop.permute.xlu0 %68
    %72 = vset.pattern.permute.xlu0 0
    %73 = vperm.xlu0 %72, %v43
    %v74 = vpop.permute.xlu0 %73
    %77 = vset.pattern.permute.xlu0 0
    %78 = vperm.xlu0 %77, %v44
    %v79 = vpop.permute.xlu0 %78
    %82 = vset.pattern.permute.xlu0 0
    %83 = vperm.xlu0 %82, %v45
    %v84 = vpop.permute.xlu0 %83
    %87 = vset.pattern.permute.xlu0 0
    %88 = vperm.xlu0 %87, %v46
    %v89 = vpop.permute.xlu0 %88
    %92 = vset.pattern.permute.xlu0 0
    %93 = vperm.xlu0 %92, %v47
    %v94 = vpop.permute.xlu0 %93
    %97 = vset.pattern.permute.xlu0 0
    %98 = vperm.xlu0 %97, %v48
    %v99 = vpop.permute.xlu0 %98
    %102 = vset.pattern.permute.xlu0 0
    %103 = vperm.xlu0 %102, %v49
    %v104 = vpop.permute.xlu0 %103
    %107 = vset.pattern.permute.xlu0 0
    %108 = vperm.xlu0 %107, %v50
    %v109 = vpop.permute.xlu0 %108
    %112 = vset.pattern.permute.xlu0 0
    %113 = vperm.xlu0 %112, %v51
    %v114 = vpop.permute.xlu0 %113
    %117 = vset.pattern.permute.xlu0 0
    %118 = vperm.xlu0 %117, %v52
    %v119 = vpop.permute.xlu0 %118
    %122 = vset.pattern.permute.xlu0 0
    %123 = vperm.xlu0 %122, %v53
    %v124 = vpop.permute.xlu0 %123
    %127 = vset.pattern.permute.xlu0 0
    %128 = vperm.xlu0 %127, %v54
    %v129 = vpop.permute.xlu0 %128
    %132 = vset.pattern.permute.xlu0 0
    %133 = vperm.xlu0 %132, %v55
    %v134 = vpop.permute.xlu0 %133
    %v152 = vunpack.c.l.b16 %v24
    %v153 = vunpack.c.l.b16 %v25
    %v154 = vunpack.c.l.b16 %v26
    %v155 = vunpack.c.l.b16 %v27
    %v156 = vunpack.c.l.b16 %v28
    %v157 = vunpack.c.l.b16 %v29
    %v158 = vunpack.c.l.b16 %v30
    %v159 = vunpack.c.l.b16 %v31
    %v160 = vunpack.c.l.b16 %v32
    %v161 = vunpack.c.l.b16 %v33
    %v162 = vunpack.c.l.b16 %v34
    %v163 = vunpack.c.l.b16 %v35
    %v164 = vunpack.c.l.b16 %v36
    %v165 = vunpack.c.l.b16 %v37
    %v166 = vunpack.c.l.b16 %v38
    %v167 = vunpack.c.l.b16 %v39
    %v168 = vpack.c.b16 %v153, %v152
    %v169 = vpack.c.b16 %v155, %v154
    %v170 = vpack.c.b16 %v157, %v156
    %v171 = vpack.c.b16 %v159, %v158
    %v172 = vpack.c.b16 %v161, %v160
    %v173 = vpack.c.b16 %v163, %v162
    %v174 = vpack.c.b16 %v165, %v164
    %v175 = vpack.c.b16 %v167, %v166
    %vm176 = vcmask 31744
    %v178 = vsel %vm176, %v168, 0
    %v181 = vsel %vm176, %v169, 0
    %v184 = vsel %vm176, %v170, 0
    %v187 = vsel %vm176, %v171, 0
    %v190 = vsel %vm176, %v172, 0
    %v193 = vsel %vm176, %v173, 0
    %v196 = vsel %vm176, %v174, 0
    %v199 = vsel %vm176, %v175, 0
    %vm201 = vcmask 1041408
    %v203 = vsel %vm201, %v23, 0
    %205 = vmatprep.subr.bf16.mxu0 0
    %206 = vmatpush1.bf16.msra.mxu0 0
    %207 = vmatprep.subr.bf16.mxu0 0
    %208 = vmatpush1.bf16.msra.mxu0 0
    %209 = vmatprep.subr.bf16.mxu0 0
    %210 = vmatpush1.bf16.msra.mxu0 0
    %211 = vmatprep.subr.bf16.mxu0 0
    %212 = vmatpush1.bf16.msra.mxu0 0
    %213 = vmatprep.subr.bf16.mxu0 0
    %214 = vmatpush1.bf16.msra.mxu0 0
    %215 = vmatprep.subr.bf16.mxu0 0
    %216 = vmatpush1.bf16.msra.mxu0 0
    %217 = vmatprep.subr.bf16.mxu0 0
    %218 = vmatpush1.bf16.msra.mxu0 0
    %219 = vmatprep.subr.bf16.mxu0 0
    %220 = vmatpush1.bf16.msra.mxu0 %v203
    %221 = vmatprep.subr.bf16.mxu0 0
    %222 = vmatpush2.bf16.msra.mxu0 0
    %223 = vmatprep.subr.bf16.mxu0 0
    %224 = vmatpush2.bf16.msra.mxu0 0
    %225 = vmatprep.subr.bf16.mxu0 0
    %226 = vmatpush2.bf16.msra.mxu0 0
    %227 = vmatprep.subr.bf16.mxu0 0
    %228 = vmatpush2.bf16.msra.mxu0 0
    %229 = vmatprep.subr.bf16.mxu0 0
    %230 = vmatpush2.bf16.msra.mxu0 0
    %231 = vmatprep.subr.bf16.mxu0 0
    %232 = vmatpush2.bf16.msra.mxu0 0
    %233 = vmatprep.subr.bf16.mxu0 0
    %234 = vmatpush2.bf16.msra.mxu0 0
    %235 = vmatprep.subr.bf16.mxu0 0
    %236 = vmatpush2.bf16.msra.mxu0 0
    %237 = vmatprep.mubr.bf16.mxu0 0
    %238 = vmatmul.mubr.bf16.gmra.mxu0 %v178
    %v239 = vpop.f32.mrf.mxu0
    %v240 = vadd.f32 %v59, %v239
    %v241 = vpop.f32.mrf.mxu0
    %v242 = vpop.f32.mrf.mxu0
    %v243 = vadd.f32 %v64, %v242
    %v244 = vpop.f32.mrf.mxu0
    %245 = vmatprep.mubr.bf16.mxu0 0
    %246 = vmatmul.mubr.bf16.gmra.mxu0 %v181
    %v247 = vpop.f32.mrf.mxu0
    %v248 = vadd.f32 %v69, %v247
    %v249 = vpop.f32.mrf.mxu0
    %v250 = vpop.f32.mrf.mxu0
    %v251 = vadd.f32 %v74, %v250
    %v252 = vpop.f32.mrf.mxu0
    %253 = vmatprep.mubr.bf16.mxu0 0
    %254 = vmatmul.mubr.bf16.gmra.mxu0 %v184
    %v255 = vpop.f32.mrf.mxu0
    %v256 = vadd.f32 %v79, %v255
    %v257 = vpop.f32.mrf.mxu0
    %v258 = vpop.f32.mrf.mxu0
    %v259 = vadd.f32 %v84, %v258
    %v260 = vpop.f32.mrf.mxu0
    %261 = vmatprep.mubr.bf16.mxu0 0
    %262 = vmatmul.mubr.bf16.gmra.mxu0 %v187
    %v263 = vpop.f32.mrf.mxu0
    %v264 = vadd.f32 %v89, %v263
    %v265 = vpop.f32.mrf.mxu0
    %v266 = vpop.f32.mrf.mxu0
    %v267 = vadd.f32 %v94, %v266
    %v268 = vpop.f32.mrf.mxu0
    %269 = vmatprep.mubr.bf16.mxu0 0
    %270 = vmatmul.mubr.bf16.gmra.mxu0 %v190
    %v271 = vpop.f32.mrf.mxu0
    %v272 = vadd.f32 %v99, %v271
    %v273 = vpop.f32.mrf.mxu0
    %v274 = vpop.f32.mrf.mxu0
    %v275 = vadd.f32 %v104, %v274
    %v276 = vpop.f32.mrf.mxu0
    %277 = vmatprep.mubr.bf16.mxu0 0
    %278 = vmatmul.mubr.bf16.gmra.mxu0 %v193
    %v279 = vpop.f32.mrf.mxu0
    %v280 = vadd.f32 %v109, %v279
    %v281 = vpop.f32.mrf.mxu0
    %v282 = vpop.f32.mrf.mxu0
    %v283 = vadd.f32 %v114, %v282
    %v284 = vpop.f32.mrf.mxu0
    %285 = vmatprep.mubr.bf16.mxu0 0
    %286 = vmatmul.mubr.bf16.gmra.mxu0 %v196
    %v287 = vpop.f32.mrf.mxu0
    %v288 = vadd.f32 %v119, %v287
    %v289 = vpop.f32.mrf.mxu0
    %v290 = vpop.f32.mrf.mxu0
    %v291 = vadd.f32 %v124, %v290
    %v292 = vpop.f32.mrf.mxu0
    %293 = vmatprep.mubr.bf16.mxu0 0
    %294 = vmatmul.mubr.bf16.gmra.mxu0 %v199
    %v295 = vpop.f32.mrf.mxu0
    %v296 = vadd.f32 %v129, %v295
    %v297 = vpop.f32.mrf.mxu0
    %v298 = vpop.f32.mrf.mxu0
    %v299 = vadd.f32 %v134, %v298
    %v300 = vpop.f32.mrf.mxu0
    %301 = vdwg.mxu0
    %v302 = vmax.f32 %v240, 0.0
    %v303 = vmax.f32 %v243, 0.0
    %v304 = vmax.f32 %v248, 0.0
    %v305 = vmax.f32 %v251, 0.0
    %v306 = vmax.f32 %v256, 0.0
    %v307 = vmax.f32 %v259, 0.0
    %v308 = vmax.f32 %v264, 0.0
    %v309 = vmax.f32 %v267, 0.0
    %v310 = vmax.f32 %v272, 0.0
    %v311 = vmax.f32 %v275, 0.0
    %v312 = vmax.f32 %v280, 0.0
    %v313 = vmax.f32 %v283, 0.0
    %v314 = vmax.f32 %v288, 0.0
    %v315 = vmax.f32 %v291, 0.0
    %v316 = vmax.f32 %v296, 0.0
    %v317 = vmax.f32 %v299, 0.0
    %v318 = vld [vmem:[%s3] sm:$0x1]
    %v319 = vpack.c.bf16 %v303, %v302
    %v320 = vpack.c.bf16 %v305, %v304
    %v321 = vpack.c.bf16 %v307, %v306
    %v322 = vpack.c.bf16 %v309, %v308
    %v323 = vpack.c.bf16 %v311, %v310
    %v324 = vpack.c.bf16 %v313, %v312
    %v325 = vpack.c.bf16 %v315, %v314
    %v326 = vpack.c.bf16 %v317, %v316
    %v327 = vld [vmem:[%s4] sm:$0x3]
    %329 = vset.pattern.permute.xlu0 0
    %330 = vperm.xlu0 %329, %v327
    %v331 = vpop.permute.xlu0 %330
    %333 = vmatprep.subr.bf16.mxu0 0
    %334 = vmatpush1.bf16.msra.mxu0 %v326
    %335 = vmatprep.subr.bf16.mxu0 0
    %336 = vmatpush1.bf16.msra.mxu0 %v325
    %337 = vmatprep.subr.bf16.mxu0 0
    %338 = vmatpush1.bf16.msra.mxu0 %v324
    %339 = vmatprep.subr.bf16.mxu0 0
    %340 = vmatpush1.bf16.msra.mxu0 %v323
    %341 = vmatprep.subr.bf16.mxu0 0
    %342 = vmatpush1.bf16.msra.mxu0 %v322
    %343 = vmatprep.subr.bf16.mxu0 0
    %344 = vmatpush1.bf16.msra.mxu0 %v321
    %345 = vmatprep.subr.bf16.mxu0 0
    %346 = vmatpush1.bf16.msra.mxu0 %v320
    %347 = vmatprep.subr.bf16.mxu0 0
    %348 = vmatpush1.bf16.msra.mxu0 %v319
    %349 = vmatprep.subr.bf16.mxu0 0
    %350 = vmatpush2.bf16.msra.mxu0 0
    %351 = vmatprep.subr.bf16.mxu0 0
    %352 = vmatpush2.bf16.msra.mxu0 0
    %353 = vmatprep.subr.bf16.mxu0 0
    %354 = vmatpush2.bf16.msra.mxu0 0
    %355 = vmatprep.subr.bf16.mxu0 0
    %356 = vmatpush2.bf16.msra.mxu0 0
    %357 = vmatprep.subr.bf16.mxu0 0
    %358 = vmatpush2.bf16.msra.mxu0 0
    %359 = vmatprep.subr.bf16.mxu0 0
    %360 = vmatpush2.bf16.msra.mxu0 0
    %361 = vmatprep.subr.bf16.mxu0 0
    %362 = vmatpush2.bf16.msra.mxu0 0
    %363 = vmatprep.subr.bf16.mxu0 0
    %364 = vmatpush2.bf16.msra.mxu0 0
    %365 = vmatprep.mubr.bf16.mxu0 0
    %366 = vmatmul.mubr.bf16.gmra.mxu0 %v318
    %v367 = vpop.f32.mrf.mxu0
    %v368 = vadd.f32 %v331, %v367
    %v369 = vpop.f32.mrf.mxu0
    %v370 = vpop.f32.mrf.mxu0
    %v371 = vpop.f32.mrf.mxu0
    %372 = vdwg.mxu0
    %v374 = vrot.slane %v368, 7
    %v376 = vsub.f32 %v368, %v374
    %v377 = vsub.f32 0.0, %v376
    %v378 = vmul.f32 %v377, 1.442695
    %v379 = vpow.pop %v378
    %v380 = vadd.f32 %v379, 1.0
    %v381 = vrcp.pop %v380
    %v382 = vmul.f32 1.0, %v381
    %v383 = vsub.f32 1.0, %v382
    %v385 = vrot.slane %v383, 1
    %vm387 = vcmask 1040384
    %v388 = vsel %vm387, %v385, %v382
    %389 = vst [vmem:[#allocation2] sm:$0x3] %v388
    // Predicated region
    $region22: #{tpu_custom_call.1} parent=1 // pred_check
      _
    $region23: #{tpu_custom_call.1} parent=1 // pred_check_branch
      %391 = sbr.rel (0) target = $region25
    $region24: #{tpu_custom_call.1} parent=1 // pred_region
      %s393 = ssub.s32 32, 32
      %394 = vsyncadd [#allocation3], %s393
      %s396 = sshll.u32 [#allocation2], 4
      %s397 = int_to_ptr.vmem [resolvable:$true] %s396
      %399 = dma.vmem_to_hbm [thread:$0]  %s397, 32, %s5, [#allocation3]
    $region25: #{tpu_custom_call.1} parent=1 // pred_fallthru
      _
    // Predicated region
    $region26: #{tpu_custom_call.1} parent=1 // pred_check
      _
    $region27: #{tpu_custom_call.1} parent=1 // pred_check_branch
      %401 = sbr.rel (0) target = $region29
    $region28: #{tpu_custom_call.1} parent=1 // pred_region
      %402 = dma.done [#allocation3], 32
    $region29: #{tpu_custom_call.1} parent=1 // pred_fallthru
      _
    %403 = vsyncpa [#allocation3], 1

</llo_original>
